<compile_context>
chip_gen: v7x
topology: tpu7x:2x2x1
jax: 0.10.0
libtpu: 0.0.40
codegen_flags: <defaults>
</compile_context>

<pallas_src>
import jax
import jax.numpy as jnp
from jax.experimental import pallas as pl
from jax.experimental.pallas import tpu as pltpu


def _box_loss_kernel(pt_ref, psum_ref, acc_ref):
    # Grid = (num_cores ["parallel"], tiles_per_core ["arbitrary"]).
    i = pl.program_id(1)

    @pl.when(i == 0)
    def _():
        acc_ref[...] = jnp.zeros_like(acc_ref)

    pt = pt_ref[...]                      # (8, tm): rows 0..3 pred, rows 4..7 target
    d = pt[0:4, :] - pt[4:8, :]           # (4, tm); masked/padded lanes are 0 - 0 = 0
    acc_ref[...] += d * d                 # pure per-lane VPU accumulate, no per-step reduce

    @pl.when(i == pl.num_programs(1) - 1)
    def _():
        # One cross-sublane + cross-lane reduction per core, broadcast into a
        # lane-dense (1, 128) output block (one block per core).
        psum_ref[...] = jnp.sum(acc_ref[...]) + jnp.zeros((1, 128), jnp.float32)


def box_coordinate_loss(obj, predictions, target, anchors, *,
                        tile_m=131072, core_split_lanes=131072):
    N, A, S1, S2, _C = predictions.shape
    assert target.shape[:4] == (N, A, S1, S2)
    assert tile_m % 128 == 0
    M = N * A * S1 * S2

    # ---- Tiling / core-split (static Python shape math) ----
    # 2 TensorCores on v7x; for small M (or 1-TC chips) the extra axis is a
    # harmless serial loop, so only split when each core gets meaningful work.
    num_cores = 2 if M >= core_split_lanes else 1
    per_core = pl.cdiv(M, num_cores)
    tiles_per_core = pl.cdiv(per_core, tile_m)
    # Shrink the tile to spread lanes evenly over tiles (keeps zero-padding < a
    # few hundred lanes instead of up to a whole tile), 128-aligned for dense vst.
    tm = pl.cdiv(pl.cdiv(per_core, tiles_per_core), 128) * 128
    Mp = num_cores * tiles_per_core * tm

    # ---- Pack pass: build the 8 coordinate rows directly in (8, M) order,
    # folding in sigmoid / anchor-divide / log and the obj mask, then zero-pad
    # to the tile multiple (zero rows contribute nothing to the sum). ----
    objb = obj.reshape(N, A, S1, S2)
    p = predictions.astype(jnp.float32)
    t = target.astype(jnp.float32)
    aw = anchors[:, 0].astype(jnp.float32).reshape(1, A, 1, 1)
    ah = anchors[:, 1].astype(jnp.float32).reshape(1, A, 1, 1)

    rows = [
        jax.nn.sigmoid(p[..., 1]),
        jax.nn.sigmoid(p[..., 2]),
        p[..., 3],
        p[..., 4],
        t[..., 1],
        t[..., 2],
        jnp.log(1e-16 + t[..., 3] / aw),
        jnp.log(1e-16 + t[..., 4] / ah),
    ]
    zero = jnp.zeros((), jnp.float32)
    packed = jnp.stack(
        [jnp.where(objb, r, zero).reshape(M) for r in rows], axis=0)   # (8, M)
    if Mp > M:
        packed = jnp.pad(packed, ((0, 0), (0, Mp - M)))

    # Denominator computed in the wrapper (fuses with the pack pass); no second
    # kernel output / count accumulator needed.
    cnt = jnp.sum(objb.astype(jnp.float32))

    partial = pl.pallas_call(
        _box_loss_kernel,
        out_shape=jax.ShapeDtypeStruct((1, num_cores * 128), jnp.float32),
        grid_spec=pltpu.PrefetchScalarGridSpec(
            num_scalar_prefetch=0,
            grid=(num_cores, tiles_per_core),
            in_specs=[
                pl.BlockSpec((8, tm), lambda c, i: (0, c * tiles_per_core + i)),
            ],
            out_specs=pl.BlockSpec((1, 128), lambda c, i: (0, c)),
            scratch_shapes=[pltpu.VMEM((4, tm), jnp.float32)],
        ),
        compiler_params=pltpu.CompilerParams(
            dimension_semantics=("parallel", "arbitrary"),
            vmem_limit_bytes=32 * 1024 * 1024,
        ),
        cost_estimate=pl.CostEstimate(
            flops=12 * Mp,
            transcendentals=0,
            bytes_accessed=32 * Mp + 4 * num_cores * 128),
    )(packed)

    total = jnp.sum(partial.reshape(num_cores, 128)[:, 0])
    # nn.MSELoss() mean over (num_obj_cells * 4) selected elements.
    # (0/0 -> NaN when there are no obj cells, matching PyTorch on empty selection.)
    return total / (4.0 * cnt)


def _reference(obj, predictions, target, anchors):
    a = anchors.reshape(1, 3, 1, 1, 2)
    p = predictions.at[..., 1:3].set(jax.nn.sigmoid(predictions[..., 1:3]))
    t = target.at[..., 3:5].set(jnp.log(1e-16 + target[..., 3:5] / a))
    pm = p[..., 1:5][obj]
    tm = t[..., 1:5][obj]
    return jnp.mean((pm - tm) ** 2)


if __name__ == "__main__":
    key = jax.random.PRNGKey(0)
    k1, k2, k3, k4 = jax.random.split(key, 4)

    N, A, S, C = 2, 3, 16, 7          # C = 5 + num_classes(2)
    predictions = jax.random.normal(k1, (N, A, S, S, C), dtype=jnp.float32)
    # target coords: keep w/h strictly positive so log() is well-defined (as in YOLO targets)
    target = jnp.abs(jax.random.normal(k2, (N, A, S, S, 6), dtype=jnp.float32)) + 0.1
    obj = jax.random.uniform(k3, (N, A, S, S)) < 0.3      # bool obj mask
    anchors = jnp.abs(jax.random.normal(k4, (A, 2), dtype=jnp.float32)) + 0.5

    loss = jax.jit(box_coordinate_loss)(obj, predictions, target, anchors)
    jax.block_until_ready(loss)

    ref = _reference(obj, predictions, target, anchors)
    assert jnp.allclose(loss, ref, rtol=1e-4, atol=1e-5), (float(loss), float(ref))

    print("KERNEL_OK")
</pallas_src>

<mosaic_0001>
module attributes {stable_mosaic.version = 11 : i64} {
  func.func @_box_loss_kernel(%arg0: i32, %arg1: i32, %arg2: memref<8x1536xf32, #tpu.memory_space<vmem>>, %arg3: memref<1x128xf32, #tpu.memory_space<vmem>>, %arg4: memref<4x1536xf32, #tpu.memory_space<vmem>>) attributes {dimension_semantics = [#tpu.dimension_semantics<parallel>, #tpu.dimension_semantics<arbitrary>], iteration_bounds = array<i64: 1, 1>, scalar_prefetch = 0 : i64, scratch_operands = 1 : i64, tpu.core_type = #tpu.core_type<tc>, window_params = [{transform_indices = @transform_0, window_bounds = array<i64: 8, 1536>}, {transform_indices = @transform_1, window_bounds = array<i64: 1, 128>}]} {
    %c0_i32 = arith.constant 0 : i32
    %0 = arith.cmpi eq, %arg1, %c0_i32 : i32
    %1 = arith.extui %0 : i1 to i32
    %c0_i32_0 = arith.constant 0 : i32
    %2 = arith.cmpi ne, %1, %c0_i32_0 : i32
    scf.if %2 {
      %cst = arith.constant 0.000000e+00 : f32
      %14 = vector.broadcast %cst : f32 to vector<4x1536xf32>
      %c0_8 = arith.constant 0 : index
      %c0_9 = arith.constant 0 : index
      %15 = vector.load %arg4[%c0_8, %c0_9] : memref<4x1536xf32, #tpu.memory_space<vmem>>, vector<4x1536xf32>
      tpu.vector_store %arg4[%c0_8, %c0_9], %14 {strides = array<i32>} : memref<4x1536xf32, #tpu.memory_space<vmem>>, vector<4x1536xf32>,
    } else {
    }
    %c0 = arith.constant 0 : index
    %c0_1 = arith.constant 0 : index
    %3 = vector.load %arg2[%c0, %c0_1] : memref<8x1536xf32, #tpu.memory_space<vmem>>, vector<8x1536xf32>
    %4 = vector.extract_strided_slice %3 {offsets = [0, 0], sizes = [4, 1536], strides = [1, 1]} : vector<8x1536xf32> to vector<4x1536xf32>
    %5 = vector.extract_strided_slice %3 {offsets = [4, 0], sizes = [4, 1536], strides = [1, 1]} : vector<8x1536xf32> to vector<4x1536xf32>
    %6 = arith.subf %4, %5 : vector<4x1536xf32>
    %c0_2 = arith.constant 0 : index
    %c0_3 = arith.constant 0 : index
    %7 = vector.load %arg4[%c0_2, %c0_3] : memref<4x1536xf32, #tpu.memory_space<vmem>>, vector<4x1536xf32>
    %8 = arith.mulf %6, %6 : vector<4x1536xf32>
    %9 = arith.addf %7, %8 : vector<4x1536xf32>
    %c0_4 = arith.constant 0 : index
    %c0_5 = arith.constant 0 : index
    %10 = vector.load %arg4[%c0_4, %c0_5] : memref<4x1536xf32, #tpu.memory_space<vmem>>, vector<4x1536xf32>
    tpu.vector_store %arg4[%c0_4, %c0_5], %9 {strides = array<i32>} : memref<4x1536xf32, #tpu.memory_space<vmem>>, vector<4x1536xf32>,
    %c0_i32_6 = arith.constant 0 : i32
    %11 = arith.cmpi eq, %arg1, %c0_i32_6 : i32
    %12 = arith.extui %11 : i1 to i32
    %c0_i32_7 = arith.constant 0 : i32
    %13 = arith.cmpi ne, %12, %c0_i32_7 : i32
    scf.if %13 {
      %c0_8 = arith.constant 0 : index
      %c0_9 = arith.constant 0 : index
      %14 = vector.load %arg4[%c0_8, %c0_9] : memref<4x1536xf32, #tpu.memory_space<vmem>>, vector<4x1536xf32>
      %15 = vector.shape_cast %14 : vector<4x1536xf32> to vector<1x4x1536xf32>
      %cst = arith.constant dense<0.000000e+00> : vector<1xf32>
      %16 = vector.multi_reduction <add>, %15, %cst [1, 2] : vector<1x4x1536xf32> to vector<1xf32>
      %17 = vector.shape_cast %16 : vector<1xf32> to vector<1x1x1xf32>
      %18 = vector.extract %17[0, 0, 0] : f32 from vector<1x1x1xf32>
      %cst_10 = arith.constant 0.000000e+00 : f32
      %19 = vector.broadcast %cst_10 : f32 to vector<1x128xf32>
      %20 = vector.broadcast %18 : f32 to vector<1x128xf32>
      %21 = arith.addf %20, %19 : vector<1x128xf32>
      %c0_11 = arith.constant 0 : index
      %c0_12 = arith.constant 0 : index
      %22 = vector.load %arg3[%c0_11, %c0_12] : memref<1x128xf32, #tpu.memory_space<vmem>>, vector<1x128xf32>
      tpu.vector_store %arg3[%c0_11, %c0_12], %21 {strides = array<i32>} : memref<1x128xf32, #tpu.memory_space<vmem>>, vector<1x128xf32>,
    } else {
    }
    return
  }
  func.func @transform_0(%arg0: i32, %arg1: i32) -> (i32, i32) {
    %c1_i32 = arith.constant 1 : i32
    %0 = arith.muli %arg0, %c1_i32 : i32
    %1 = arith.addi %0, %arg1 : i32
    %c0_i32 = arith.constant 0 : i32
    %c0_i32_0 = arith.constant 0 : i32
    return %c0_i32, %1 : i32, i32
  }
  func.func @transform_1(%arg0: i32, %arg1: i32) -> (i32, i32) {
    %c0_i32 = arith.constant 0 : i32
    %c0_i32_0 = arith.constant 0 : i32
    return %c0_i32, %arg0 : i32, i32
  }
}

</mosaic_0001>

<llo_original>
// kernel: box_coordinate_loss.1
$region0: #{box_coordinate_loss.1}
  #allocation0 [shape = 'u32[]', space=smem, size = 0x4, offset = 0x4, fixed_abs, tag = 'smem constant byte address 0x4 - core index']
  #allocation1 [shape = 'u32[144,128]{1,0:T(1,128)}', space=vmem, size = 0x12000, scoped, tag = 'internal scratch']
  #allocation2 [shape = 'f32[4,1536]{1,0:T(4,128)}', space=vmem, size = 0x6000, scoped, tag = 'scratch operand']
  %s0 = inlined_call_operand.vmem [shape: f32[8,1536], index: 0, kind: input, shape index: {}]
  %s1 = inlined_call_operand.vmem [shape: f32[1,128], index: 1, kind: output, shape index: {}]
  %s2 = sld [smem:[#allocation0]]
  $region22: #{box_coordinate_loss.1} parent=0
    _
  %s4 = ssub.s32 1, %s2
  %s5 = scalar_select 0, %s4, %s2
  // Predicated region
  $region2: #{box_coordinate_loss.1} parent=0 // pred_check
    _
  $region3: #{box_coordinate_loss.1} parent=0 // pred_check_branch
    %7 = sbr.rel (0) target = $region5
  $region4: #{box_coordinate_loss.1} parent=0 // pred_region
    %s8 = sadd.s32 0, 0
    %s9 = smul.u32 12, %s8
    %p10 = scmp.lt.s32.totalorder %s9, 11
    %s11 = scalar_select %p10, %s9, 11
    %s12 = smul.addr %s11, 8
    %s13 = scalar_lea.vmem %s0, %s12
    %s14 = sadd.s32 0, 0
    %s15 = smul.u32 12, %s14
  $region5: #{box_coordinate_loss.1} parent=0 // pred_fallthru
    _
  %s16 = sadd.s32 0, 0
  %s17 = smul.u32 12, %s16
  %p18 = scmp.lt.s32.totalorder %s17, 11
  %s19 = scalar_select %p18, %s17, 11
  %s20 = smul.addr %s19, 8
  %s21 = scalar_lea.vmem %s0, %s20
  %s22 = sadd.s32 0, 0
  %s23 = smul.u32 12, %s22
  %p24 = scmp.lt.s32.totalorder %s23, 11
  %s25 = scalar_select %p24, %s23, 11
  %s26 = smul.addr %s25, 8
  %s27 = scalar_lea.vmem %s0, %s26
  %s28 = sadd.s32 0, 0
  %s29 = smul.u32 12, %s28
  %p30 = scmp.eq.s32.totalorder 0, 0
  // Predicated region
  $region6: #{box_coordinate_loss.1} parent=0 // pred_check
    %p31 = pneg %p30
  $region7: #{box_coordinate_loss.1} parent=0 // pred_check_branch
    %33 = sbr.rel (%p31) target = $region9
  $region8: #{box_coordinate_loss.1} parent=0 // pred_region
    %34 = vst [vmem:[#allocation2] sm:$0xff] 0.0
    %35 = vst [vmem:[#allocation2 + $0x8] sm:$0xff] 0.0
    %36 = vst [vmem:[#allocation2 + $0x10] sm:$0xff] 0.0
    %37 = vst [vmem:[#allocation2 + $0x18] sm:$0xff] 0.0
    %38 = vst [vmem:[#allocation2 + $0x20] sm:$0xff] 0.0
    %39 = vst [vmem:[#allocation2 + $0x28] sm:$0xff] 0.0
  $region9: #{box_coordinate_loss.1} parent=0 // pred_fallthru
    _
  %v40 = vld [vmem:[%s27] sm:$0xff]
  %v41 = vld [vmem:[%s27 + $0x8] sm:$0xff]
  %v42 = vld [vmem:[%s27 + $0x10] sm:$0xff]
  %v43 = vld [vmem:[%s27 + $0x18] sm:$0xff]
  %v44 = vld [vmem:[%s27 + $0x20] sm:$0xff]
  %v45 = vld [vmem:[%s27 + $0x28] sm:$0xff]
  %v46 = vld [vmem:[%s27 + $0x30] sm:$0xff]
  %v47 = vld [vmem:[%s27 + $0x38] sm:$0xff]
  %v48 = vld [vmem:[%s27 + $0x40] sm:$0xff]
  %v49 = vld [vmem:[%s27 + $0x48] sm:$0xff]
  %v50 = vld [vmem:[%s27 + $0x50] sm:$0xff]
  %v51 = vld [vmem:[%s27 + $0x58] sm:$0xff]
  %v64 = vrot.slane %v40, 4
  %v65 = vrot.slane %v41, 4
  %v66 = vrot.slane %v42, 4
  %v67 = vrot.slane %v43, 4
  %v68 = vrot.slane %v44, 4
  %v69 = vrot.slane %v45, 4
  %v70 = vrot.slane %v46, 4
  %v71 = vrot.slane %v47, 4
  %v72 = vrot.slane %v48, 4
  %v73 = vrot.slane %v49, 4
  %v74 = vrot.slane %v50, 4
  %v75 = vrot.slane %v51, 4
  %v88 = vsub.f32 %v40, %v64
  %v89 = vsub.f32 %v41, %v65
  %v90 = vsub.f32 %v42, %v66
  %v91 = vsub.f32 %v43, %v67
  %v92 = vsub.f32 %v44, %v68
  %v93 = vsub.f32 %v45, %v69
  %v94 = vsub.f32 %v46, %v70
  %v95 = vsub.f32 %v47, %v71
  %v96 = vsub.f32 %v48, %v72
  %v97 = vsub.f32 %v49, %v73
  %v98 = vsub.f32 %v50, %v74
  %v99 = vsub.f32 %v51, %v75
  %v100 = vld [vmem:[#allocation2] sm:$0xff]
  %v101 = vld [vmem:[#allocation2 + $0x8] sm:$0xff]
  %v102 = vld [vmem:[#allocation2 + $0x10] sm:$0xff]
  %v103 = vld [vmem:[#allocation2 + $0x18] sm:$0xff]
  %v104 = vld [vmem:[#allocation2 + $0x20] sm:$0xff]
  %v105 = vld [vmem:[#allocation2 + $0x28] sm:$0xff]
  %v106 = vmul.f32 %v88, %v88
  %v107 = vmul.f32 %v89, %v89
  %v108 = vmul.f32 %v90, %v90
  %v109 = vmul.f32 %v91, %v91
  %v110 = vmul.f32 %v92, %v92
  %v111 = vmul.f32 %v93, %v93
  %v112 = vmul.f32 %v94, %v94
  %v113 = vmul.f32 %v95, %v95
  %v114 = vmul.f32 %v96, %v96
  %v115 = vmul.f32 %v97, %v97
  %v116 = vmul.f32 %v98, %v98
  %v117 = vmul.f32 %v99, %v99
  %v130 = vcombine.low %v106, %v107
  %v131 = vcombine.low %v108, %v109
  %v132 = vcombine.low %v110, %v111
  %v133 = vcombine.low %v112, %v113
  %v134 = vcombine.low %v114, %v115
  %v135 = vcombine.low %v116, %v117
  %v142 = vadd.f32 %v100, %v130
  %v143 = vadd.f32 %v101, %v131
  %v144 = vadd.f32 %v102, %v132
  %v145 = vadd.f32 %v103, %v133
  %v146 = vadd.f32 %v104, %v134
  %v147 = vadd.f32 %v105, %v135
  %148 = vst [vmem:[#allocation2] sm:$0xff] %v142
  %149 = vst [vmem:[#allocation2 + $0x8] sm:$0xff] %v143
  %150 = vst [vmem:[#allocation2 + $0x10] sm:$0xff] %v144
  %151 = vst [vmem:[#allocation2 + $0x18] sm:$0xff] %v145
  %152 = vst [vmem:[#allocation2 + $0x20] sm:$0xff] %v146
  %153 = vst [vmem:[#allocation2 + $0x28] sm:$0xff] %v147
  // Predicated region
  $region10: #{box_coordinate_loss.1} parent=0 // pred_check
    %p154 = pneg %p30
  $region11: #{box_coordinate_loss.1} parent=0 // pred_check_branch
    %156 = sbr.rel (%p154) target = $region13
  $region12: #{box_coordinate_loss.1} parent=0 // pred_region
    %v157 = vld [vmem:[#allocation2] sm:$0xff]
    %v158 = vld [vmem:[#allocation2 + $0x8] sm:$0xff]
    %v159 = vld [vmem:[#allocation2 + $0x10] sm:$0xff]
    %v160 = vld [vmem:[#allocation2 + $0x18] sm:$0xff]
    %v161 = vld [vmem:[#allocation2 + $0x20] sm:$0xff]
    %v162 = vld [vmem:[#allocation2 + $0x28] sm:$0xff]
    %v169 = vcombine.high %v157, %v157
    %v170 = vcombine.high %v158, %v158
    %v171 = vcombine.high %v159, %v159
    %v172 = vcombine.high %v160, %v160
    %v173 = vcombine.high %v161, %v161
    %v174 = vcombine.high %v162, %v162
    %vm181 = vcmask 1043456
    %v182 = vsel %vm181, %v157, 0.0
    %v183 = vsel %vm181, %v169, 0.0
    %v184 = vadd.f32 %v182, %v183
    %v185 = vsel %vm181, %v158, 0.0
    %v186 = vadd.f32 %v184, %v185
    %v187 = vsel %vm181, %v170, 0.0
    %v188 = vadd.f32 %v186, %v187
    %v189 = vsel %vm181, %v159, 0.0
    %v190 = vadd.f32 %v188, %v189
    %v191 = vsel %vm181, %v171, 0.0
    %v192 = vadd.f32 %v190, %v191
    %v193 = vsel %vm181, %v160, 0.0
    %v194 = vadd.f32 %v192, %v193
    %v195 = vsel %vm181, %v172, 0.0
    %v196 = vadd.f32 %v194, %v195
    %v197 = vsel %vm181, %v161, 0.0
    %v198 = vadd.f32 %v196, %v197
    %v199 = vsel %vm181, %v173, 0.0
    %v200 = vadd.f32 %v198, %v199
    %v201 = vsel %vm181, %v162, 0.0
    %v202 = vadd.f32 %v200, %v201
    %v203 = vsel %vm181, %v174, 0.0
    %v204 = vadd.f32 %v202, %v203
    %205 = vadd.xlane.f32.xlu0 %v204
    %v206 = vpop.xlane.xlu0 %205
    %v207 = vrot.slane %v206, 4
    %v208 = vadd.f32 %v206, %v207
    %v209 = vrot.slane %v208, 2
    %v210 = vadd.f32 %v208, %v209
    %v211 = vrot.slane %v210, 1
    %v212 = vadd.f32 %v210, %v211
    %s213 = vtos %v212
    %v214 = vstv %s213
    %v215 = vadd.f32 %v214, 0.0
    %216 = vst [vmem:[%s1] sm:$0x1] %v215
  $region13: #{box_coordinate_loss.1} parent=0 // pred_fallthru
    _
  // Predicated region
  $region14: #{box_coordinate_loss.1} parent=0 // pred_check
    _
  $region15: #{box_coordinate_loss.1} parent=0 // pred_check_branch
    %218 = sbr.rel (0) target = $region17
  $region16: #{box_coordinate_loss.1} parent=0 // pred_region
    _
  $region17: #{box_coordinate_loss.1} parent=0 // pred_fallthru
    _
  // Predicated region
  $region18: #{box_coordinate_loss.1} parent=0 // pred_check
    _
  $region19: #{box_coordinate_loss.1} parent=0 // pred_check_branch
    %220 = sbr.rel (0) target = $region21
  $region20: #{box_coordinate_loss.1} parent=0 // pred_region
    _
  $region21: #{box_coordinate_loss.1} parent=0 // pred_fallthru
    _

</llo_original>
